<compile_context>
chip_gen: v6e
topology: v6e:2x2x1
jax: 0.10.0
libtpu: 0.0.40
codegen_flags: <defaults>
</compile_context>

<pallas_src>
import jax
import jax.numpy as jnp
from jax.experimental import pallas as pl
from jax.experimental.pallas import tpu as pltpu


def _make_kernel(nkh, nkw, Ho, Wo, negative_slope):
    """Kernel: one batch element per grid step.

    xs_ref : (1, Hs, Ws, Cs)       space-to-depth image (Cs = stride^2 * Cin)
    w_ref  : (nkh, nkw, Cs, CoutP) per-tap weight matrices
    b_ref  : (1, CoutP)            bias row (f32)
    o_ref  : (1, CoutP, Ho*Wo)     channel-major output slab
    """
    def kernel(xs_ref, w_ref, b_ref, o_ref):
        xs = xs_ref[0]                      # (Hs, Ws, Cs)
        cs = xs.shape[-1]
        w = w_ref[...]                      # tiny, resident
        cout = w.shape[-1]

        acc = jnp.zeros((Ho * Wo, cout), jnp.float32)
        # 4 unit-shift taps (static slices) -> accumulate small MXU dots.
        for ih in range(nkh):
            for jh in range(nkw):
                v = xs[ih:ih + Ho, jh:jh + Wo, :]        # (Ho, Wo, Cs)
                v2 = v.reshape(Ho * Wo, cs)              # (M, Cs)
                acc = acc + jnp.dot(v2, w[ih, jh],
                                    preferred_element_type=jnp.float32)

        acc = acc + b_ref[...]                           # bias (broadcast rows)
        acc = jnp.where(acc >= 0, acc, negative_slope * acc)   # LeakyReLU(0.2)
        o_ref[0] = acc.T.astype(o_ref.dtype)             # (CoutP, Ho*Wo)
    return kernel


def cl_forward(x_nchw, weight, bias, *, stride=2, padding=1,
               negative_slope=0.2, use_bf16=False):
    """Forward of CL: Conv2d(4x4, stride=2, pad=1) + LeakyReLU(0.2).

    x_nchw : (N, Cin, H, W)       float32 (PyTorch NCHW)
    weight : (Cout, Cin, kh, kw)  PyTorch OIHW layout
    bias   : (Cout,)
    returns: (N, Cout, Ho, Wo)
    """
    C_out, C_in, kh, kw = weight.shape
    N, C, H, W = x_nchw.shape
    assert C == C_in
    s = stride
    assert kh % s == 0 and kw % s == 0, "kernel size must be a multiple of stride"
    Hp, Wp = H + 2 * padding, W + 2 * padding
    assert Hp % s == 0 and Wp % s == 0, "padded spatial dims must divide stride"

    Hs, Ws = Hp // s, Wp // s
    nkh, nkw = kh // s, kw // s
    Ho, Wo = Hs - nkh + 1, Ws - nkw + 1          # == (H+2p-kh)//s + 1
    Cs = s * s * C_in                            # space-to-depth channels

    # --- single layout pass: pad + space-to-depth + channels-last (no 16x im2col)
    xp = jnp.pad(x_nchw, ((0, 0), (0, 0), (padding, padding), (padding, padding)))
    xs = xp.reshape(N, C_in, Hs, s, Ws, s)
    xs = jnp.transpose(xs, (0, 2, 4, 3, 5, 1)).reshape(N, Hs, Ws, Cs)

    # --- per-tap weight matrices: w2[ih, jh, (pr*s+pc)*Cin + k, o]
    C_out_p = ((C_out + 7) // 8) * 8             # sublane-align transposed output
    w2 = weight.reshape(C_out, C_in, nkh, s, nkw, s)
    w2 = jnp.transpose(w2, (2, 4, 3, 5, 1, 0)).reshape(nkh, nkw, Cs, C_out)
    if C_out_p != C_out:
        w2 = jnp.pad(w2, ((0, 0), (0, 0), (0, 0), (0, C_out_p - C_out)))
    b_row = jnp.pad(bias, (0, C_out_p - C_out)).reshape(1, C_out_p).astype(jnp.float32)

    # Optional bf16 fast path (f32 accumulation in-kernel).
    compute_dtype = jnp.bfloat16 if use_bf16 else xs.dtype
    xs = xs.astype(compute_dtype)
    w2 = w2.astype(compute_dtype)

    kernel = _make_kernel(nkh, nkw, Ho, Wo, negative_slope)

    out = pl.pallas_call(
        kernel,
        out_shape=jax.ShapeDtypeStruct((N, C_out_p, Ho * Wo), x_nchw.dtype),
        grid_spec=pltpu.PrefetchScalarGridSpec(
            num_scalar_prefetch=0,
            grid=(N,),                                           # one image / step
            in_specs=[
                pl.BlockSpec((1, Hs, Ws, Cs), lambda n: (n, 0, 0, 0)),
                pl.BlockSpec((nkh, nkw, Cs, C_out_p), lambda n: (0, 0, 0, 0)),
                pl.BlockSpec((1, C_out_p), lambda n: (0, 0)),
            ],
            out_specs=pl.BlockSpec((1, C_out_p, Ho * Wo), lambda n: (n, 0, 0)),
        ),
        compiler_params=pltpu.CompilerParams(
            dimension_semantics=("parallel",),                   # shards N over v7x TCs
            vmem_limit_bytes=32 * 1024 * 1024),
    )(xs, w2, b_row)

    # TODO(synk): for very large images, add a row-tiled grid axis with halo DMA
    # (memory_space=pl.ANY + make_async_copy) instead of one image per step.
    out = out[:, :C_out, :]                      # no-op when Cout already aligned
    return out.reshape(N, C_out, Ho, Wo)         # free reshape: already NCHW order


if __name__ == "__main__":
    # CL(input_channel=4, output_channel=8)
    input_channel, output_channel, kh, kw = 4, 8, 4, 4
    N, H, W = 2, 16, 16

    key = jax.random.PRNGKey(0)
    kx, kw_key, kb_key = jax.random.split(key, 3)

    x = jax.random.normal(kx, (N, input_channel, H, W), dtype=jnp.float32)

    # deterministic PyTorch-like uniform init: U(-1/sqrt(fan_in), 1/sqrt(fan_in))
    fan_in = input_channel * kh * kw
    bound = 1.0 / (fan_in ** 0.5)
    weight = jax.random.uniform(kw_key, (output_channel, input_channel, kh, kw),
                                minval=-bound, maxval=bound, dtype=jnp.float32)
    bias = jax.random.uniform(kb_key, (output_channel,),
                              minval=-bound, maxval=bound, dtype=jnp.float32)

    y = cl_forward(x, weight, bias)
    y = jax.block_until_ready(y)

    # sanity check vs. pure-JAX reference (same semantics as the PyTorch module)
    ref = jax.lax.conv_general_dilated(
        x, weight, window_strides=(2, 2), padding=((1, 1), (1, 1)),
        dimension_numbers=("NCHW", "OIHW", "NCHW"),
        precision=jax.lax.Precision.HIGHEST)
    ref = ref + bias.reshape(1, -1, 1, 1)
    ref = jnp.where(ref >= 0, ref, 0.2 * ref)
    assert y.shape == (N, output_channel, H // 2, W // 2)
    assert jnp.allclose(y, ref, atol=1e-4, rtol=1e-4), \
        float(jnp.max(jnp.abs(y - ref)))

    print("KERNEL_OK")
</pallas_src>

<mosaic_0001>
module attributes {stable_mosaic.version = 11 : i64} {
  func.func @kernel(%arg0: i32, %arg1: memref<1x9x9x16xf32, #tpu.memory_space<vmem>>, %arg2: memref<2x2x16x8xf32, #tpu.memory_space<vmem>>, %arg3: memref<1x8xf32, #tpu.memory_space<vmem>>, %arg4: memref<1x8x64xf32, #tpu.memory_space<vmem>>) attributes {dimension_semantics = [#tpu.dimension_semantics<parallel>], iteration_bounds = array<i64: 2>, scalar_prefetch = 0 : i64, scratch_operands = 0 : i64, tpu.core_type = #tpu.core_type<tc>, window_params = [{transform_indices = @transform_0, window_bounds = array<i64: 1, 9, 9, 16>}, {pipeline_mode = #tpu.pipeline_mode<synchronous>, transform_indices = @transform_1, window_bounds = array<i64: 2, 2, 16, 8>}, {pipeline_mode = #tpu.pipeline_mode<synchronous>, transform_indices = @transform_2, window_bounds = array<i64: 1, 8>}, {transform_indices = @transform_3, window_bounds = array<i64: 1, 8, 64>}]} {
    %c0 = arith.constant 0 : index
    %c0_0 = arith.constant 0 : index
    %c0_1 = arith.constant 0 : index
    %c0_2 = arith.constant 0 : index
    %0 = vector.load %arg1[%c0, %c0_0, %c0_1, %c0_2] : memref<1x9x9x16xf32, #tpu.memory_space<vmem>>, vector<1x9x9x16xf32>
    %1 = vector.shape_cast %0 : vector<1x9x9x16xf32> to vector<9x9x16xf32>
    %c0_3 = arith.constant 0 : index
    %c0_4 = arith.constant 0 : index
    %c0_5 = arith.constant 0 : index
    %c0_6 = arith.constant 0 : index
    %2 = vector.load %arg2[%c0_3, %c0_4, %c0_5, %c0_6] : memref<2x2x16x8xf32, #tpu.memory_space<vmem>>, vector<2x2x16x8xf32>
    %cst = arith.constant 0.000000e+00 : f32
    %3 = vector.broadcast %cst : f32 to vector<64x8xf32>
    %4 = vector.extract_strided_slice %1 {offsets = [0, 0, 0], sizes = [8, 8, 16], strides = [1, 1, 1]} : vector<9x9x16xf32> to vector<8x8x16xf32>
    %5 = vector.shape_cast %4 : vector<8x8x16xf32> to vector<64x16xf32>
    %6 = vector.extract_strided_slice %2 {offsets = [0, 0, 0, 0], sizes = [1, 1, 16, 8], strides = [1, 1, 1, 1]} : vector<2x2x16x8xf32> to vector<1x1x16x8xf32>
    %7 = vector.shape_cast %6 : vector<1x1x16x8xf32> to vector<16x8xf32>
    %cst_7 = arith.constant dense<0.000000e+00> : vector<64x8xf32>
    %8 = tpu.matmul %5, %7, %cst_7 {dimension_numbers = #tpu.dot_dimension_numbers<[1], [0], [0], [1], [0, 0, 1, 1], [], []>} : vector<64x16xf32>, vector<16x8xf32>, vector<64x8xf32> -> vector<64x8xf32>
    %9 = arith.addf %3, %8 : vector<64x8xf32>
    %10 = vector.extract_strided_slice %1 {offsets = [0, 1, 0], sizes = [8, 8, 16], strides = [1, 1, 1]} : vector<9x9x16xf32> to vector<8x8x16xf32>
    %11 = vector.shape_cast %10 : vector<8x8x16xf32> to vector<64x16xf32>
    %12 = vector.extract_strided_slice %2 {offsets = [0, 1, 0, 0], sizes = [1, 1, 16, 8], strides = [1, 1, 1, 1]} : vector<2x2x16x8xf32> to vector<1x1x16x8xf32>
    %13 = vector.shape_cast %12 : vector<1x1x16x8xf32> to vector<16x8xf32>
    %cst_8 = arith.constant dense<0.000000e+00> : vector<64x8xf32>
    %14 = tpu.matmul %11, %13, %cst_8 {dimension_numbers = #tpu.dot_dimension_numbers<[1], [0], [0], [1], [0, 0, 1, 1], [], []>} : vector<64x16xf32>, vector<16x8xf32>, vector<64x8xf32> -> vector<64x8xf32>
    %15 = arith.addf %9, %14 : vector<64x8xf32>
    %16 = vector.extract_strided_slice %1 {offsets = [1, 0, 0], sizes = [8, 8, 16], strides = [1, 1, 1]} : vector<9x9x16xf32> to vector<8x8x16xf32>
    %17 = vector.shape_cast %16 : vector<8x8x16xf32> to vector<64x16xf32>
    %18 = vector.extract_strided_slice %2 {offsets = [1, 0, 0, 0], sizes = [1, 1, 16, 8], strides = [1, 1, 1, 1]} : vector<2x2x16x8xf32> to vector<1x1x16x8xf32>
    %19 = vector.shape_cast %18 : vector<1x1x16x8xf32> to vector<16x8xf32>
    %cst_9 = arith.constant dense<0.000000e+00> : vector<64x8xf32>
    %20 = tpu.matmul %17, %19, %cst_9 {dimension_numbers = #tpu.dot_dimension_numbers<[1], [0], [0], [1], [0, 0, 1, 1], [], []>} : vector<64x16xf32>, vector<16x8xf32>, vector<64x8xf32> -> vector<64x8xf32>
    %21 = arith.addf %15, %20 : vector<64x8xf32>
    %22 = vector.extract_strided_slice %1 {offsets = [1, 1, 0], sizes = [8, 8, 16], strides = [1, 1, 1]} : vector<9x9x16xf32> to vector<8x8x16xf32>
    %23 = vector.shape_cast %22 : vector<8x8x16xf32> to vector<64x16xf32>
    %24 = vector.extract_strided_slice %2 {offsets = [1, 1, 0, 0], sizes = [1, 1, 16, 8], strides = [1, 1, 1, 1]} : vector<2x2x16x8xf32> to vector<1x1x16x8xf32>
    %25 = vector.shape_cast %24 : vector<1x1x16x8xf32> to vector<16x8xf32>
    %cst_10 = arith.constant dense<0.000000e+00> : vector<64x8xf32>
    %26 = tpu.matmul %23, %25, %cst_10 {dimension_numbers = #tpu.dot_dimension_numbers<[1], [0], [0], [1], [0, 0, 1, 1], [], []>} : vector<64x16xf32>, vector<16x8xf32>, vector<64x8xf32> -> vector<64x8xf32>
    %27 = arith.addf %21, %26 : vector<64x8xf32>
    %c0_11 = arith.constant 0 : index
    %c0_12 = arith.constant 0 : index
    %28 = vector.load %arg3[%c0_11, %c0_12] : memref<1x8xf32, #tpu.memory_space<vmem>>, vector<1x8xf32>
    %29 = vector.broadcast %28 : vector<1x8xf32> to vector<64x8xf32>
    %30 = arith.addf %27, %29 : vector<64x8xf32>
    %cst_13 = arith.constant 0.000000e+00 : f32
    %31 = vector.broadcast %cst_13 : f32 to vector<64x8xf32>
    %32 = arith.cmpf oge, %30, %31 : vector<64x8xf32>
    %cst_14 = arith.constant 2.000000e-01 : f32
    %33 = vector.broadcast %cst_14 : f32 to vector<64x8xf32>
    %34 = arith.mulf %33, %30 : vector<64x8xf32>
    %35 = arith.select %32, %30, %34 : vector<64x8xi1>, vector<64x8xf32>
    %36 = tpu.transpose %35, [1, 0] : vector<64x8xf32> -> vector<8x64xf32>
    %c0_15 = arith.constant 0 : index
    %c0_16 = arith.constant 0 : index
    %c0_17 = arith.constant 0 : index
    %37 = vector.load %arg4[%c0_15, %c0_16, %c0_17] : memref<1x8x64xf32, #tpu.memory_space<vmem>>, vector<1x8x64xf32>
    %38 = vector.shape_cast %37 : vector<1x8x64xf32> to vector<8x64xf32>
    %39 = vector.shape_cast %36 : vector<8x64xf32> to vector<1x8x64xf32>
    tpu.vector_store %arg4[%c0_15, %c0_16, %c0_17], %39 {strides = array<i32>} : memref<1x8x64xf32, #tpu.memory_space<vmem>>, vector<1x8x64xf32>,
    return
  }
  func.func @transform_0(%arg0: i32) -> (i32, i32, i32, i32) {
    %c0_i32 = arith.constant 0 : i32
    %c0_i32_0 = arith.constant 0 : i32
    %c0_i32_1 = arith.constant 0 : i32
    %c0_i32_2 = arith.constant 0 : i32
    return %arg0, %c0_i32, %c0_i32_0, %c0_i32_1 : i32, i32, i32, i32
  }
  func.func @transform_1(%arg0: i32) -> (i32, i32, i32, i32) {
    %c0_i32 = arith.constant 0 : i32
    %c0_i32_0 = arith.constant 0 : i32
    %c0_i32_1 = arith.constant 0 : i32
    %c0_i32_2 = arith.constant 0 : i32
    %c0_i32_3 = arith.constant 0 : i32
    return %c0_i32, %c0_i32_0, %c0_i32_1, %c0_i32_2 : i32, i32, i32, i32
  }
  func.func @transform_2(%arg0: i32) -> (i32, i32) {
    %c0_i32 = arith.constant 0 : i32
    %c0_i32_0 = arith.constant 0 : i32
    %c0_i32_1 = arith.constant 0 : i32
    return %c0_i32, %c0_i32_0 : i32, i32
  }
  func.func @transform_3(%arg0: i32) -> (i32, i32, i32) {
    %c0_i32 = arith.constant 0 : i32
    %c0_i32_0 = arith.constant 0 : i32
    %c0_i32_1 = arith.constant 0 : i32
    return %arg0, %c0_i32, %c0_i32_0 : i32, i32, i32
  }
}

</mosaic_0001>

<llo_original>
// kernel: tpu_custom_call.1
$region0: #{tpu_custom_call.1}
  #allocation0 [shape = 'u32[]', space=smem, size = 0x4, offset = 0x4, fixed_abs, tag = 'smem constant byte address 0x4 - core index']
  #allocation1 [shape = 'u32[144,128]{1,0:T(1,128)}', space=vmem, size = 0x12000, scoped, tag = 'internal scratch']
  %s0 = inlined_call_operand.vmem [shape: f32[2,9,9,16], index: 0, kind: input, shape index: {}]
  %s1 = inlined_call_operand.vmem [shape: f32[2,2,16,8], index: 1, kind: input, shape index: {}]
  %s2 = inlined_call_operand.vmem [shape: f32[1,8], index: 2, kind: input, shape index: {}]
  %s3 = inlined_call_operand.hbm [shape: f32[2,8,64], index: 3, kind: output, shape index: {}]
  %s4 = sld [smem:[#allocation0]]
  $region45: #{tpu_custom_call.1} parent=0
    _
  %s6 = ssub.s32 1, %s4
  %s7 = scalar_select 0, %s6, %s4
  $region1: #{tpu_custom_call.1} parent=0
    #allocation2 [shape = 'u8[8192]{0}', space=vmem, size = 0x2000, scoped, tag = 'output window, operand 0']
    #allocation3 [shape = 's32[2]{0}', space=sflag, size = 0x8, scoped, tag = 'scoped memory for tpu_custom_call.1']
    %8 = vsyncpa [#allocation3], 0
    %s9 = scalar_lea.sflag [#allocation3], 1
    %10 = vsyncpa %s9, 0
    loop: start=0, step=1, limit=4
    $region2: #{tpu_custom_call.1} parent=1 // loop_pre_header
      _
    $region3: #{tpu_custom_call.1} parent=1 // loop_header
      %s12 = sphi 0, %s16
      %p13 = scmp.ge.s32.totalorder %s12, 4
      %s22 = sphi 0, %s24
      %s25 = sphi 0, %s22
      %s26 = sphi 0, %s25
      %s42 = sphi 0, %s26
      %s46 = sphi 0, %s46
      %s48 = sphi 0, %s46
      %s49 = sphi 0, %s48
      %s63 = sphi 0, %s49
      %s67 = sphi 0, %s67
      %s69 = sphi 0, %s67
      %s70 = sphi 0, %s69
      %s84 = sphi 0, %s70
      %s90 = sphi 0, %s92
      %s93 = sphi 0, %s90
      %s94 = sphi 0, %s93
      %s110 = sphi 0, %s94
    $region4: #{tpu_custom_call.1} parent=1 // loop_header_branch
      %15 = sbr.rel (%p13) target = $region8
    $region5: #{tpu_custom_call.1} parent=1 // loop_body
      %s17 = ssub.s32 %s12, 1
      %s18 = ssub.s32 %s12, 2
      %s19 = sadd.s32 %s12, 1
      %s20 = ssub.s32 %s12, %s19
      %p21 = scmp.eq.s32.totalorder %s20, 0
      %s23 = sadd.s32 %s22, 1
      %s24 = scalar_select %p21, %s22, %s23
      %p27 = pneg %p21
      %p28 = scmp.eq.s32.totalorder %s12, 1
      %p29 = por %p27, %p28
      %p30 = scmp.ne.s32.totalorder %s22, %s25
      %p31 = scmp.eq.s32.totalorder %s12, 0
      %p32 = por %p30, %p31
      %p33 = scmp.ne.s32.totalorder %s22, %s25
      %p34 = scmp.eq.s32.totalorder %s17, 1
      %p35 = por %p33, %p34
      %p36 = scmp.ne.s32.totalorder %s25, %s26
      %p37 = scmp.eq.s32.totalorder %s17, 0
      %p38 = por %p36, %p37
      %p39 = scmp.ne.s32.totalorder %s25, %s26
      %p40 = scmp.eq.s32.totalorder %s18, 1
      %p41 = por %p39, %p40
      %p43 = scmp.ne.s32.totalorder %s26, %s42
      %p44 = scmp.eq.s32.totalorder %s18, 0
      %p45 = por %p43, %p44
      %s47 = sadd.s32 %s46, 1
      %p50 = scmp.eq.s32.totalorder %s12, 1
      %p51 = scmp.ne.s32.totalorder %s46, %s48
      %p52 = scmp.eq.s32.totalorder %s12, 0
      %p53 = por %p51, %p52
      %p54 = scmp.ne.s32.totalorder %s46, %s48
      %p55 = scmp.eq.s32.totalorder %s17, 1
      %p56 = por %p54, %p55
      %p57 = scmp.ne.s32.totalorder %s48, %s49
      %p58 = scmp.eq.s32.totalorder %s17, 0
      %p59 = por %p57, %p58
      %p60 = scmp.ne.s32.totalorder %s48, %s49
      %p61 = scmp.eq.s32.totalorder %s18, 1
      %p62 = por %p60, %p61
      %p64 = scmp.ne.s32.totalorder %s49, %s63
      %p65 = scmp.eq.s32.totalorder %s18, 0
      %p66 = por %p64, %p65
      %s68 = sadd.s32 %s67, 1
      %p71 = scmp.eq.s32.totalorder %s12, 1
      %p72 = scmp.ne.s32.totalorder %s67, %s69
      %p73 = scmp.eq.s32.totalorder %s12, 0
      %p74 = por %p72, %p73
      %p75 = scmp.ne.s32.totalorder %s67, %s69
      %p76 = scmp.eq.s32.totalorder %s17, 1
      %p77 = por %p75, %p76
      %p78 = scmp.ne.s32.totalorder %s69, %s70
      %p79 = scmp.eq.s32.totalorder %s17, 0
      %p80 = por %p78, %p79
      %p81 = scmp.ne.s32.totalorder %s69, %s70
      %p82 = scmp.eq.s32.totalorder %s18, 1
      %p83 = por %p81, %p82
      %p85 = scmp.ne.s32.totalorder %s70, %s84
      %p86 = scmp.eq.s32.totalorder %s18, 0
      %p87 = por %p85, %p86
      %s88 = ssub.s32 %s12, %s19
      %p89 = scmp.eq.s32.totalorder %s88, 0
      %s91 = sadd.s32 %s90, 1
      %s92 = scalar_select %p89, %s90, %s91
      %p95 = pneg %p89
      %p96 = scmp.eq.s32.totalorder %s12, 1
      %p97 = por %p95, %p96
      %p98 = scmp.ne.s32.totalorder %s90, %s93
      %p99 = scmp.eq.s32.totalorder %s12, 0
      %p100 = por %p98, %p99
      %p101 = scmp.ne.s32.totalorder %s90, %s93
      %p102 = scmp.eq.s32.totalorder %s17, 1
      %p103 = por %p101, %p102
      %p104 = scmp.ne.s32.totalorder %s93, %s94
      %p105 = scmp.eq.s32.totalorder %s17, 0
      %p106 = por %p104, %p105
      %p107 = scmp.ne.s32.totalorder %s93, %s94
      %p108 = scmp.eq.s32.totalorder %s18, 1
      %p109 = por %p107, %p108
      %p111 = scmp.ne.s32.totalorder %s94, %s110
      %p112 = scmp.eq.s32.totalorder %s18, 0
      %p113 = por %p111, %p112
      %p114 = scmp.le.s32.totalorder 1, %s12
      %p115 = scmp.lt.s32.totalorder %s12, 3
      %p116 = pnand %p114, %p115
      %p117 = pneg %p116
      // Predicated region
      $region9: #{tpu_custom_call.1} parent=5 // pred_check
        _
      $region10: #{tpu_custom_call.1} parent=5 // pred_check_branch
        %119 = sbr.rel (%p116) target = $region12
      $region11: #{tpu_custom_call.1} parent=5 // pred_region
        %s120 = ssub.s32 %s12, 1
        // Predicated region
        $region13: #{tpu_custom_call.1} parent=11 // pred_check
          %p121 = pneg %p59
        $region14: #{tpu_custom_call.1} parent=11 // pred_check_branch
          %123 = sbr.rel (%p121) target = $region16
        $region15: #{tpu_custom_call.1} parent=11 // pred_region
          _
        $region16: #{tpu_custom_call.1} parent=11 // pred_fallthru
          _
        // Predicated region
        $region17: #{tpu_custom_call.1} parent=11 // pred_check
          %p124 = pneg %p80
        $region18: #{tpu_custom_call.1} parent=11 // pred_check_branch
          %126 = sbr.rel (%p124) target = $region20
        $region19: #{tpu_custom_call.1} parent=11 // pred_region
          _
        $region20: #{tpu_custom_call.1} parent=11 // pred_fallthru
          _
      $region12: #{tpu_custom_call.1} parent=5 // pred_fallthru
        _
      %p127 = scmp.lt.s32.totalorder %s12, 2
      // Predicated region
      $region21: #{tpu_custom_call.1} parent=5 // pred_check
        %p128 = pneg %p127
      $region22: #{tpu_custom_call.1} parent=5 // pred_check_branch
        %130 = sbr.rel (%p128) target = $region24
      $region23: #{tpu_custom_call.1} parent=5 // pred_region
        // Predicated region
        $region25: #{tpu_custom_call.1} parent=23 // pred_check
          %p131 = pneg %p32
        $region26: #{tpu_custom_call.1} parent=23 // pred_check_branch
          %133 = sbr.rel (%p131) target = $region28
        $region27: #{tpu_custom_call.1} parent=23 // pred_region
          %p134 = scmp.lt.s32.totalorder %s12, 1
          %s135 = scalar_select %p134, %s12, 1
          %s136 = smul.addr %s135, 18
          %s137 = smul.addr %s136, 8
          %s138 = scalar_lea.vmem %s0, %s137
        $region28: #{tpu_custom_call.1} parent=23 // pred_fallthru
          _
      $region24: #{tpu_custom_call.1} parent=5 // pred_fallthru
        _
      %p139 = scmp.le.s32.totalorder 1, %s12
      %p140 = scmp.lt.s32.totalorder %s12, 3
      %p141 = pnand %p139, %p140
      %p142 = pneg %p141
      // Predicated region
      $region29: #{tpu_custom_call.1} parent=5 // pred_check
        _
      $region30: #{tpu_custom_call.1} parent=5 // pred_check_branch
        %144 = sbr.rel (%p141) target = $region32
      $region31: #{tpu_custom_call.1} parent=5 // pred_region
        %s145 = ssub.s32 %s12, 1
        %p146 = scmp.lt.s32.totalorder %s17, 1
        %s147 = scalar_select %p146, %s17, 1
        %s148 = smul.addr %s147, 18
        %s149 = smul.addr %s148, 8
        %s150 = scalar_lea.vmem %s0, %s149
        %p151 = pneg %p38
        %p152 = pneg %p35
        %p153 = pneg %p59
        %p154 = pneg %p56
        %p155 = pneg %p80
        %p156 = pneg %p77
        %p157 = pneg %p106
        %p158 = pneg %p103
        %s159 = sand.u32 %s93, 1
        %s160 = scalar_lea.sflag [#allocation3], %s159
        %s161 = sand.u32 %s93, 1
        %s162 = smul.addr %s161, 8
        %s163 = scalar_lea.vmem [#allocation2], %s162
        %p164 = scmp.lt.s32.totalorder %s17, 1
        %s165 = scalar_select %p164, %s17, 1
        %s166 = smul.addr %s165, 18
        %s167 = smul.addr %s166, 8
        %s168 = scalar_lea.vmem %s0, %s167
        %v169 = vld [vmem:[%s168] sm:$0xff]
        %v170 = vld [vmem:[%s168 + $0x8] sm:$0x1]
        %v171 = vld [vmem:[%s168 + $0x10] sm:$0xff]
        %v172 = vld [vmem:[%s168 + $0x18] sm:$0x1]
        %v173 = vld [vmem:[%s168 + $0x20] sm:$0xff]
        %v174 = vld [vmem:[%s168 + $0x28] sm:$0x1]
        %v175 = vld [vmem:[%s168 + $0x30] sm:$0xff]
        %v176 = vld [vmem:[%s168 + $0x38] sm:$0x1]
        %v177 = vld [vmem:[%s168 + $0x40] sm:$0xff]
        %v178 = vld [vmem:[%s168 + $0x48] sm:$0x1]
        %v179 = vld [vmem:[%s168 + $0x50] sm:$0xff]
        %v180 = vld [vmem:[%s168 + $0x58] sm:$0x1]
        %v181 = vld [vmem:[%s168 + $0x60] sm:$0xff]
        %v182 = vld [vmem:[%s168 + $0x68] sm:$0x1]
        %v183 = vld [vmem:[%s168 + $0x70] sm:$0xff]
        %v184 = vld [vmem:[%s168 + $0x78] sm:$0x1]
        %v185 = vld [vmem:[%s168 + $0x80] sm:$0xff]
        %v186 = vld [vmem:[%s168 + $0x88] sm:$0x1]
        %v187 = vld [vmem:[%s1] sm:$0xff]
        %v188 = vld [vmem:[%s1 + $0x8] sm:$0xff]
        %v189 = vld [vmem:[%s1 + $0x10] sm:$0xff]
        %v190 = vld [vmem:[%s1 + $0x18] sm:$0xff]
        %v191 = vld [vmem:[%s1 + $0x20] sm:$0xff]
        %v192 = vld [vmem:[%s1 + $0x28] sm:$0xff]
        %v193 = vld [vmem:[%s1 + $0x30] sm:$0xff]
        %v194 = vld [vmem:[%s1 + $0x38] sm:$0xff]
        %vm211 = vcmask 1046528
        %v212 = vrot.slane %v169, 1
        %v213 = vrot.slane %v170, 1
        %v214 = vsel %vm211, %v212, %v213
        %v215 = vrot.slane %v171, 1
        %v216 = vrot.slane %v172, 1
        %v217 = vsel %vm211, %v215, %v216
        %v218 = vrot.slane %v173, 1
        %v219 = vrot.slane %v174, 1
        %v220 = vsel %vm211, %v218, %v219
        %v221 = vrot.slane %v175, 1
        %v222 = vrot.slane %v176, 1
        %v223 = vsel %vm211, %v221, %v222
        %v224 = vrot.slane %v177, 1
        %v225 = vrot.slane %v178, 1
        %v226 = vsel %vm211, %v224, %v225
        %v227 = vrot.slane %v179, 1
        %v228 = vrot.slane %v180, 1
        %v229 = vsel %vm211, %v227, %v228
        %v230 = vrot.slane %v181, 1
        %v231 = vrot.slane %v182, 1
        %v232 = vsel %vm211, %v230, %v231
        %v233 = vrot.slane %v183, 1
        %v234 = vrot.slane %v184, 1
        %v235 = vsel %vm211, %v233, %v234
        %vm236 = vcmask 130048
        %v237 = vsel %vm236, %v214, 0
        %v239 = vsel %vm236, %v217, 0
        %v241 = vsel %vm236, %v220, 0
        %v243 = vsel %vm236, %v223, 0
        %v245 = vsel %vm236, %v226, 0
        %v247 = vsel %vm236, %v229, 0
        %v249 = vsel %vm236, %v232, 0
        %v251 = vsel %vm236, %v235, 0
        %253 = vmatprep.subr.mxu0 0.0
        %254 = vmatpush1.msra.mxu0 0.0
        %255 = vmatprep.subr.mxu0 0.0
        %256 = vmatpush1.msra.mxu0 0.0
        %257 = vmatprep.subr.mxu0 0.0
        %258 = vmatpush1.msra.mxu0 0.0
        %259 = vmatprep.subr.mxu0 0.0
        %260 = vmatpush1.msra.mxu0 0.0
        %261 = vmatprep.subr.mxu0 0.0
        %262 = vmatpush1.msra.mxu0 0.0
        %263 = vmatprep.subr.mxu0 0.0
        %264 = vmatpush1.msra.mxu0 0.0
        %265 = vmatprep.subr.mxu0 0.0
        %266 = vmatpush1.msra.mxu0 0.0
        %267 = vmatprep.subr.mxu0 0.0
        %268 = vmatpush1.msra.mxu0 0.0
        %269 = vmatprep.subr.mxu0 0.0
        %270 = vmatpush1.msra.mxu0 0.0
        %271 = vmatprep.subr.mxu0 0.0
        %272 = vmatpush1.msra.mxu0 0.0
        %273 = vmatprep.subr.mxu0 0.0
        %274 = vmatpush1.msra.mxu0 0.0
        %275 = vmatprep.subr.mxu0 0.0
        %276 = vmatpush1.msra.mxu0 0.0
        %277 = vmatprep.subr.mxu0 0.0
        %278 = vmatpush1.msra.mxu0 0.0
        %279 = vmatprep.subr.mxu0 0.0
        %280 = vmatpush1.msra.mxu0 0.0
        %281 = vmatprep.subr.mxu0 0.0
        %282 = vmatpush1.msra.mxu0 %v190
        %283 = vmatprep.subr.mxu0 0.0
        %284 = vmatpush1.msra.mxu0 %v189
        %285 = vmatprep.subr.mxu0 0.0
        %286 = vmatpush2.msra.mxu0 0.0
        %287 = vmatprep.subr.mxu0 0.0
        %288 = vmatpush2.msra.mxu0 0.0
        %289 = vmatprep.subr.mxu0 0.0
        %290 = vmatpush2.msra.mxu0 0.0
        %291 = vmatprep.subr.mxu0 0.0
        %292 = vmatpush2.msra.mxu0 0.0
        %293 = vmatprep.subr.mxu0 0.0
        %294 = vmatpush2.msra.mxu0 0.0
        %295 = vmatprep.subr.mxu0 0.0
        %296 = vmatpush2.msra.mxu0 0.0
        %297 = vmatprep.subr.mxu0 0.0
        %298 = vmatpush2.msra.mxu0 0.0
        %299 = vmatprep.subr.mxu0 0.0
        %300 = vmatpush2.msra.mxu0 0.0
        %301 = vmatprep.subr.mxu0 0.0
        %302 = vmatpush2.msra.mxu0 0.0
        %303 = vmatprep.subr.mxu0 0.0
        %304 = vmatpush2.msra.mxu0 0.0
        %305 = vmatprep.subr.mxu0 0.0
        %306 = vmatpush2.msra.mxu0 0.0
        %307 = vmatprep.subr.mxu0 0.0
        %308 = vmatpush2.msra.mxu0 0.0
        %309 = vmatprep.subr.mxu0 0.0
        %310 = vmatpush2.msra.mxu0 0.0
        %311 = vmatprep.subr.mxu0 0.0
        %312 = vmatpush2.msra.mxu0 0.0
        %313 = vmatprep.subr.mxu0 0.0
        %314 = vmatpush2.msra.mxu0 0.0
        %315 = vmatprep.subr.mxu0 0.0
        %316 = vmatpush2.msra.mxu0 0.0
        %317 = vmatprep.mubr.f32.mxu0 0.0
        %318 = vmatmul.mubr.f32.gmra.mxu0 %v237
        %v319 = vpop.f32.mrf.mxu0
        %v320 = vadd.f32 0.0, %v319
        %v321 = vpop.f32.mrf.mxu0
        %322 = vmatprep.mubr.f32.mxu0 0.0
        %323 = vmatmul.mubr.f32.gmra.mxu0 %v239
        %v324 = vpop.f32.mrf.mxu0
        %v325 = vadd.f32 0.0, %v324
        %v326 = vpop.f32.mrf.mxu0
        %327 = vmatprep.mubr.f32.mxu0 0.0
        %328 = vmatmul.mubr.f32.gmra.mxu0 %v241
        %v329 = vpop.f32.mrf.mxu0
        %v330 = vadd.f32 0.0, %v329
        %v331 = vpop.f32.mrf.mxu0
        %332 = vmatprep.mubr.f32.mxu0 0.0
        %333 = vmatmul.mubr.f32.gmra.mxu0 %v243
        %v334 = vpop.f32.mrf.mxu0
        %v335 = vadd.f32 0.0, %v334
        %v336 = vpop.f32.mrf.mxu0
        %337 = vmatprep.mubr.f32.mxu0 0.0
        %338 = vmatmul.mubr.f32.gmra.mxu0 %v245
        %v339 = vpop.f32.mrf.mxu0
        %v340 = vadd.f32 0.0, %v339
        %v341 = vpop.f32.mrf.mxu0
        %342 = vmatprep.mubr.f32.mxu0 0.0
        %343 = vmatmul.mubr.f32.gmra.mxu0 %v247
        %v344 = vpop.f32.mrf.mxu0
        %v345 = vadd.f32 0.0, %v344
        %v346 = vpop.f32.mrf.mxu0
        %347 = vmatprep.mubr.f32.mxu0 0.0
        %348 = vmatmul.mubr.f32.gmra.mxu0 %v249
        %v349 = vpop.f32.mrf.mxu0
        %v350 = vadd.f32 0.0, %v349
        %v351 = vpop.f32.mrf.mxu0
        %352 = vmatprep.mubr.f32.mxu0 0.0
        %353 = vmatmul.mubr.f32.gmra.mxu0 %v251
        %v354 = vpop.f32.mrf.mxu0
        %v355 = vadd.f32 0.0, %v354
        %v356 = vpop.f32.mrf.mxu0
        %357 = vdwg.mxu0
        %v358 = vsel %vm236, %v169, 0
        %v360 = vsel %vm236, %v171, 0
        %v362 = vsel %vm236, %v173, 0
        %v364 = vsel %vm236, %v175, 0
        %v366 = vsel %vm236, %v177, 0
        %v368 = vsel %vm236, %v179, 0
        %v370 = vsel %vm236, %v181, 0
        %v372 = vsel %vm236, %v183, 0
        %374 = vmatprep.subr.mxu0 0.0
        %375 = vmatpush1.msra.mxu0 0.0
        %376 = vmatprep.subr.mxu0 0.0
        %377 = vmatpush1.msra.mxu0 0.0
        %378 = vmatprep.subr.mxu0 0.0
        %379 = vmatpush1.msra.mxu0 0.0
        %380 = vmatprep.subr.mxu0 0.0
        %381 = vmatpush1.msra.mxu0 0.0
        %382 = vmatprep.subr.mxu0 0.0
        %383 = vmatpush1.msra.mxu0 0.0
        %384 = vmatprep.subr.mxu0 0.0
        %385 = vmatpush1.msra.mxu0 0.0
        %386 = vmatprep.subr.mxu0 0.0
        %387 = vmatpush1.msra.mxu0 0.0
        %388 = vmatprep.subr.mxu0 0.0
        %389 = vmatpush1.msra.mxu0 0.0
        %390 = vmatprep.subr.mxu0 0.0
        %391 = vmatpush1.msra.mxu0 0.0
        %392 = vmatprep.subr.mxu0 0.0
        %393 = vmatpush1.msra.mxu0 0.0
        %394 = vmatprep.subr.mxu0 0.0
        %395 = vmatpush1.msra.mxu0 0.0
        %396 = vmatprep.subr.mxu0 0.0
        %397 = vmatpush1.msra.mxu0 0.0
        %398 = vmatprep.subr.mxu0 0.0
        %399 = vmatpush1.msra.mxu0 0.0
        %400 = vmatprep.subr.mxu0 0.0
        %401 = vmatpush1.msra.mxu0 0.0
        %402 = vmatprep.subr.mxu0 0.0
        %403 = vmatpush1.msra.mxu0 %v188
        %404 = vmatprep.subr.mxu0 0.0
        %405 = vmatpush1.msra.mxu0 %v187
        %406 = vmatprep.subr.mxu0 0.0
        %407 = vmatpush2.msra.mxu0 0.0
        %408 = vmatprep.subr.mxu0 0.0
        %409 = vmatpush2.msra.mxu0 0.0
        %410 = vmatprep.subr.mxu0 0.0
        %411 = vmatpush2.msra.mxu0 0.0
        %412 = vmatprep.subr.mxu0 0.0
        %413 = vmatpush2.msra.mxu0 0.0
        %414 = vmatprep.subr.mxu0 0.0
        %415 = vmatpush2.msra.mxu0 0.0
        %416 = vmatprep.subr.mxu0 0.0
        %417 = vmatpush2.msra.mxu0 0.0
        %418 = vmatprep.subr.mxu0 0.0
        %419 = vmatpush2.msra.mxu0 0.0
        %420 = vmatprep.subr.mxu0 0.0
        %421 = vmatpush2.msra.mxu0 0.0
        %422 = vmatprep.subr.mxu0 0.0
        %423 = vmatpush2.msra.mxu0 0.0
        %424 = vmatprep.subr.mxu0 0.0
        %425 = vmatpush2.msra.mxu0 0.0
        %426 = vmatprep.subr.mxu0 0.0
        %427 = vmatpush2.msra.mxu0 0.0
        %428 = vmatprep.subr.mxu0 0.0
        %429 = vmatpush2.msra.mxu0 0.0
        %430 = vmatprep.subr.mxu0 0.0
        %431 = vmatpush2.msra.mxu0 0.0
        %432 = vmatprep.subr.mxu0 0.0
        %433 = vmatpush2.msra.mxu0 0.0
        %434 = vmatprep.subr.mxu0 0.0
        %435 = vmatpush2.msra.mxu0 0.0
        %436 = vmatprep.subr.mxu0 0.0
        %437 = vmatpush2.msra.mxu0 0.0
        %438 = vmatprep.mubr.f32.mxu0 0.0
        %439 = vmatmul.mubr.f32.gmra.mxu0 %v358
        %v440 = vpop.f32.mrf.mxu0
        %v441 = vadd.f32 %v320, %v440
        %v442 = vpop.f32.mrf.mxu0
        %443 = vmatprep.mubr.f32.mxu0 0.0
        %444 = vmatmul.mubr.f32.gmra.mxu0 %v360
        %v445 = vpop.f32.mrf.mxu0
        %v446 = vadd.f32 %v325, %v445
        %v447 = vpop.f32.mrf.mxu0
        %448 = vmatprep.mubr.f32.mxu0 0.0
        %449 = vmatmul.mubr.f32.gmra.mxu0 %v362
        %v450 = vpop.f32.mrf.mxu0
        %v451 = vadd.f32 %v330, %v450
        %v452 = vpop.f32.mrf.mxu0
        %453 = vmatprep.mubr.f32.mxu0 0.0
        %454 = vmatmul.mubr.f32.gmra.mxu0 %v364
        %v455 = vpop.f32.mrf.mxu0
        %v456 = vadd.f32 %v335, %v455
        %v457 = vpop.f32.mrf.mxu0
        %458 = vmatprep.mubr.f32.mxu0 0.0
        %459 = vmatmul.mubr.f32.gmra.mxu0 %v366
        %v460 = vpop.f32.mrf.mxu0
        %v461 = vadd.f32 %v340, %v460
        %v462 = vpop.f32.mrf.mxu0
        %463 = vmatprep.mubr.f32.mxu0 0.0
        %464 = vmatmul.mubr.f32.gmra.mxu0 %v368
        %v465 = vpop.f32.mrf.mxu0
        %v466 = vadd.f32 %v345, %v465
        %v467 = vpop.f32.mrf.mxu0
        %468 = vmatprep.mubr.f32.mxu0 0.0
        %469 = vmatmul.mubr.f32.gmra.mxu0 %v370
        %v470 = vpop.f32.mrf.mxu0
        %v471 = vadd.f32 %v350, %v470
        %v472 = vpop.f32.mrf.mxu0
        %473 = vmatprep.mubr.f32.mxu0 0.0
        %474 = vmatmul.mubr.f32.gmra.mxu0 %v372
        %v475 = vpop.f32.mrf.mxu0
        %v476 = vadd.f32 %v355, %v475
        %v477 = vpop.f32.mrf.mxu0
        %478 = vdwg.mxu0
        %v480 = vsel %vm236, %v185, 0
        %482 = vmatprep.subr.mxu0 0.0
        %483 = vmatpush1.msra.mxu0 0.0
        %484 = vmatprep.subr.mxu0 0.0
        %485 = vmatpush1.msra.mxu0 0.0
        %486 = vmatprep.subr.mxu0 0.0
        %487 = vmatpush1.msra.mxu0 0.0
        %488 = vmatprep.subr.mxu0 0.0
        %489 = vmatpush1.msra.mxu0 0.0
        %490 = vmatprep.subr.mxu0 0.0
        %491 = vmatpush1.msra.mxu0 0.0
        %492 = vmatprep.subr.mxu0 0.0
        %493 = vmatpush1.msra.mxu0 0.0
        %494 = vmatprep.subr.mxu0 0.0
        %495 = vmatpush1.msra.mxu0 0.0
        %496 = vmatprep.subr.mxu0 0.0
        %497 = vmatpush1.msra.mxu0 0.0
        %498 = vmatprep.subr.mxu0 0.0
        %499 = vmatpush1.msra.mxu0 0.0
        %500 = vmatprep.subr.mxu0 0.0
        %501 = vmatpush1.msra.mxu0 0.0
        %502 = vmatprep.subr.mxu0 0.0
        %503 = vmatpush1.msra.mxu0 0.0
        %504 = vmatprep.subr.mxu0 0.0
        %505 = vmatpush1.msra.mxu0 0.0
        %506 = vmatprep.subr.mxu0 0.0
        %507 = vmatpush1.msra.mxu0 0.0
        %508 = vmatprep.subr.mxu0 0.0
        %509 = vmatpush1.msra.mxu0 0.0
        %510 = vmatprep.subr.mxu0 0.0
        %511 = vmatpush1.msra.mxu0 %v192
        %512 = vmatprep.subr.mxu0 0.0
        %513 = vmatpush1.msra.mxu0 %v191
        %514 = vmatprep.subr.mxu0 0.0
        %515 = vmatpush2.msra.mxu0 0.0
        %516 = vmatprep.subr.mxu0 0.0
        %517 = vmatpush2.msra.mxu0 0.0
        %518 = vmatprep.subr.mxu0 0.0
        %519 = vmatpush2.msra.mxu0 0.0
        %520 = vmatprep.subr.mxu0 0.0
        %521 = vmatpush2.msra.mxu0 0.0
        %522 = vmatprep.subr.mxu0 0.0
        %523 = vmatpush2.msra.mxu0 0.0
        %524 = vmatprep.subr.mxu0 0.0
        %525 = vmatpush2.msra.mxu0 0.0
        %526 = vmatprep.subr.mxu0 0.0
        %527 = vmatpush2.msra.mxu0 0.0
        %528 = vmatprep.subr.mxu0 0.0
        %529 = vmatpush2.msra.mxu0 0.0
        %530 = vmatprep.subr.mxu0 0.0
        %531 = vmatpush2.msra.mxu0 0.0
        %532 = vmatprep.subr.mxu0 0.0
        %533 = vmatpush2.msra.mxu0 0.0
        %534 = vmatprep.subr.mxu0 0.0
        %535 = vmatpush2.msra.mxu0 0.0
        %536 = vmatprep.subr.mxu0 0.0
        %537 = vmatpush2.msra.mxu0 0.0
        %538 = vmatprep.subr.mxu0 0.0
        %539 = vmatpush2.msra.mxu0 0.0
        %540 = vmatprep.subr.mxu0 0.0
        %541 = vmatpush2.msra.mxu0 0.0
        %542 = vmatprep.subr.mxu0 0.0
        %543 = vmatpush2.msra.mxu0 0.0
        %544 = vmatprep.subr.mxu0 0.0
        %545 = vmatpush2.msra.mxu0 0.0
        %546 = vmatprep.mubr.f32.mxu0 0.0
        %547 = vmatmul.mubr.f32.gmra.mxu0 %v360
        %v548 = vpop.f32.mrf.mxu0
        %v549 = vadd.f32 0.0, %v548
        %v550 = vpop.f32.mrf.mxu0
        %551 = vmatprep.mubr.f32.mxu0 0.0
        %552 = vmatmul.mubr.f32.gmra.mxu0 %v362
        %v553 = vpop.f32.mrf.mxu0
        %v554 = vadd.f32 0.0, %v553
        %v555 = vpop.f32.mrf.mxu0
        %556 = vmatprep.mubr.f32.mxu0 0.0
        %557 = vmatmul.mubr.f32.gmra.mxu0 %v364
        %v558 = vpop.f32.mrf.mxu0
        %v559 = vadd.f32 0.0, %v558
        %v560 = vpop.f32.mrf.mxu0
        %561 = vmatprep.mubr.f32.mxu0 0.0
        %562 = vmatmul.mubr.f32.gmra.mxu0 %v366
        %v563 = vpop.f32.mrf.mxu0
        %v564 = vadd.f32 0.0, %v563
        %v565 = vpop.f32.mrf.mxu0
        %566 = vmatprep.mubr.f32.mxu0 0.0
        %567 = vmatmul.mubr.f32.gmra.mxu0 %v368
        %v568 = vpop.f32.mrf.mxu0
        %v569 = vadd.f32 0.0, %v568
        %v570 = vpop.f32.mrf.mxu0
        %571 = vmatprep.mubr.f32.mxu0 0.0
        %572 = vmatmul.mubr.f32.gmra.mxu0 %v370
        %v573 = vpop.f32.mrf.mxu0
        %v574 = vadd.f32 0.0, %v573
        %v575 = vpop.f32.mrf.mxu0
        %576 = vmatprep.mubr.f32.mxu0 0.0
        %577 = vmatmul.mubr.f32.gmra.mxu0 %v372
        %v578 = vpop.f32.mrf.mxu0
        %v579 = vadd.f32 0.0, %v578
        %v580 = vpop.f32.mrf.mxu0
        %581 = vmatprep.mubr.f32.mxu0 0.0
        %582 = vmatmul.mubr.f32.gmra.mxu0 %v480
        %v583 = vpop.f32.mrf.mxu0
        %v584 = vadd.f32 0.0, %v583
        %v585 = vpop.f32.mrf.mxu0
        %586 = vdwg.mxu0
        %v587 = vadd.f32 %v441, %v549
        %v588 = vadd.f32 %v446, %v554
        %v589 = vadd.f32 %v451, %v559
        %v590 = vadd.f32 %v456, %v564
        %v591 = vadd.f32 %v461, %v569
        %v592 = vadd.f32 %v466, %v574
        %v593 = vadd.f32 %v471, %v579
        %v594 = vadd.f32 %v476, %v584
        %v596 = vrot.slane %v185, 1
        %v597 = vrot.slane %v186, 1
        %v598 = vsel %vm211, %v596, %v597
        %v599 = vsel %vm236, %v598, 0
        %601 = vmatprep.subr.mxu0 0.0
        %602 = vmatpush1.msra.mxu0 0.0
        %603 = vmatprep.subr.mxu0 0.0
        %604 = vmatpush1.msra.mxu0 0.0
        %605 = vmatprep.subr.mxu0 0.0
        %606 = vmatpush1.msra.mxu0 0.0
        %607 = vmatprep.subr.mxu0 0.0
        %608 = vmatpush1.msra.mxu0 0.0
        %609 = vmatprep.subr.mxu0 0.0
        %610 = vmatpush1.msra.mxu0 0.0
        %611 = vmatprep.subr.mxu0 0.0
        %612 = vmatpush1.msra.mxu0 0.0
        %613 = vmatprep.subr.mxu0 0.0
        %614 = vmatpush1.msra.mxu0 0.0
        %615 = vmatprep.subr.mxu0 0.0
        %616 = vmatpush1.msra.mxu0 0.0
        %617 = vmatprep.subr.mxu0 0.0
        %618 = vmatpush1.msra.mxu0 0.0
        %619 = vmatprep.subr.mxu0 0.0
        %620 = vmatpush1.msra.mxu0 0.0
        %621 = vmatprep.subr.mxu0 0.0
        %622 = vmatpush1.msra.mxu0 0.0
        %623 = vmatprep.subr.mxu0 0.0
        %624 = vmatpush1.msra.mxu0 0.0
        %625 = vmatprep.subr.mxu0 0.0
        %626 = vmatpush1.msra.mxu0 0.0
        %627 = vmatprep.subr.mxu0 0.0
        %628 = vmatpush1.msra.mxu0 0.0
        %629 = vmatprep.subr.mxu0 0.0
        %630 = vmatpush1.msra.mxu0 %v194
        %631 = vmatprep.subr.mxu0 0.0
        %632 = vmatpush1.msra.mxu0 %v193
        %633 = vmatprep.subr.mxu0 0.0
        %634 = vmatpush2.msra.mxu0 0.0
        %635 = vmatprep.subr.mxu0 0.0
        %636 = vmatpush2.msra.mxu0 0.0
        %637 = vmatprep.subr.mxu0 0.0
        %638 = vmatpush2.msra.mxu0 0.0
        %639 = vmatprep.subr.mxu0 0.0
        %640 = vmatpush2.msra.mxu0 0.0
        %641 = vmatprep.subr.mxu0 0.0
        %642 = vmatpush2.msra.mxu0 0.0
        %643 = vmatprep.subr.mxu0 0.0
        %644 = vmatpush2.msra.mxu0 0.0
        %645 = vmatprep.subr.mxu0 0.0
        %646 = vmatpush2.msra.mxu0 0.0
        %647 = vmatprep.subr.mxu0 0.0
        %648 = vmatpush2.msra.mxu0 0.0
        %649 = vmatprep.subr.mxu0 0.0
        %650 = vmatpush2.msra.mxu0 0.0
        %651 = vmatprep.subr.mxu0 0.0
        %652 = vmatpush2.msra.mxu0 0.0
        %653 = vmatprep.subr.mxu0 0.0
        %654 = vmatpush2.msra.mxu0 0.0
        %655 = vmatprep.subr.mxu0 0.0
        %656 = vmatpush2.msra.mxu0 0.0
        %657 = vmatprep.subr.mxu0 0.0
        %658 = vmatpush2.msra.mxu0 0.0
        %659 = vmatprep.subr.mxu0 0.0
        %660 = vmatpush2.msra.mxu0 0.0
        %661 = vmatprep.subr.mxu0 0.0
        %662 = vmatpush2.msra.mxu0 0.0
        %663 = vmatprep.subr.mxu0 0.0
        %664 = vmatpush2.msra.mxu0 0.0
        %665 = vmatprep.mubr.f32.mxu0 0.0
        %666 = vmatmul.mubr.f32.gmra.mxu0 %v239
        %v667 = vpop.f32.mrf.mxu0
        %v668 = vadd.f32 0.0, %v667
        %v669 = vpop.f32.mrf.mxu0
        %670 = vmatprep.mubr.f32.mxu0 0.0
        %671 = vmatmul.mubr.f32.gmra.mxu0 %v241
        %v672 = vpop.f32.mrf.mxu0
        %v673 = vadd.f32 0.0, %v672
        %v674 = vpop.f32.mrf.mxu0
        %675 = vmatprep.mubr.f32.mxu0 0.0
        %676 = vmatmul.mubr.f32.gmra.mxu0 %v243
        %v677 = vpop.f32.mrf.mxu0
        %v678 = vadd.f32 0.0, %v677
        %v679 = vpop.f32.mrf.mxu0
        %680 = vmatprep.mubr.f32.mxu0 0.0
        %681 = vmatmul.mubr.f32.gmra.mxu0 %v245
        %v682 = vpop.f32.mrf.mxu0
        %v683 = vadd.f32 0.0, %v682
        %v684 = vpop.f32.mrf.mxu0
        %685 = vmatprep.mubr.f32.mxu0 0.0
        %686 = vmatmul.mubr.f32.gmra.mxu0 %v247
        %v687 = vpop.f32.mrf.mxu0
        %v688 = vadd.f32 0.0, %v687
        %v689 = vpop.f32.mrf.mxu0
        %690 = vmatprep.mubr.f32.mxu0 0.0
        %691 = vmatmul.mubr.f32.gmra.mxu0 %v249
        %v692 = vpop.f32.mrf.mxu0
        %v693 = vadd.f32 0.0, %v692
        %v694 = vpop.f32.mrf.mxu0
        %695 = vmatprep.mubr.f32.mxu0 0.0
        %696 = vmatmul.mubr.f32.gmra.mxu0 %v251
        %v697 = vpop.f32.mrf.mxu0
        %v698 = vadd.f32 0.0, %v697
        %v699 = vpop.f32.mrf.mxu0
        %700 = vmatprep.mubr.f32.mxu0 0.0
        %701 = vmatmul.mubr.f32.gmra.mxu0 %v599
        %v702 = vpop.f32.mrf.mxu0
        %v703 = vadd.f32 0.0, %v702
        %v704 = vpop.f32.mrf.mxu0
        %705 = vdwg.mxu0
        %v706 = vadd.f32 %v587, %v668
        %v707 = vadd.f32 %v588, %v673
        %v708 = vadd.f32 %v589, %v678
        %v709 = vadd.f32 %v590, %v683
        %v710 = vadd.f32 %v591, %v688
        %v711 = vadd.f32 %v592, %v693
        %v712 = vadd.f32 %v593, %v698
        %v713 = vadd.f32 %v594, %v703
        %v714 = vld [vmem:[%s2] sm:$0x1]
        %v716 = vlaneseq
        %v717 = vshrl.u32 %v716, 7
        %v718 = vsub.s32 0, %v717
        %v719 = vrot.slane %v714, %v718
        %v721 = vadd.f32 %v706, %v719
        %v722 = vadd.f32 %v707, %v719
        %v723 = vadd.f32 %v708, %v719
        %v724 = vadd.f32 %v709, %v719
        %v725 = vadd.f32 %v710, %v719
        %v726 = vadd.f32 %v711, %v719
        %v727 = vadd.f32 %v712, %v719
        %v728 = vadd.f32 %v713, %v719
        %vm729 = vcmp.ge.f32.partialorder %v721, 0.0
        %vm730 = vcmp.ge.f32.partialorder %v722, 0.0
        %vm731 = vcmp.ge.f32.partialorder %v723, 0.0
        %vm732 = vcmp.ge.f32.partialorder %v724, 0.0
        %vm733 = vcmp.ge.f32.partialorder %v725, 0.0
        %vm734 = vcmp.ge.f32.partialorder %v726, 0.0
        %vm735 = vcmp.ge.f32.partialorder %v727, 0.0
        %vm736 = vcmp.ge.f32.partialorder %v728, 0.0
        %v737 = vmul.f32 %v721, 0.2
        %v738 = vmul.f32 %v722, 0.2
        %v739 = vmul.f32 %v723, 0.2
        %v740 = vmul.f32 %v724, 0.2
        %v741 = vmul.f32 %v725, 0.2
        %v742 = vmul.f32 %v726, 0.2
        %v743 = vmul.f32 %v727, 0.2
        %v744 = vmul.f32 %v728, 0.2
        %v745 = vsel %vm729, %v721, %v737
        %v746 = vsel %vm730, %v722, %v738
        %v747 = vsel %vm731, %v723, %v739
        %v748 = vsel %vm732, %v724, %v740
        %v749 = vsel %vm733, %v725, %v741
        %v750 = vsel %vm734, %v726, %v742
        %v751 = vsel %vm735, %v727, %v743
        %v752 = vsel %vm736, %v728, %v744
        %753 = vxpose.xlu0.b32.start [1/16] %v745, 128
        %754 = vxpose.xlu0.b32.cont [2/16] %v746, 128
        %755 = vxpose.xlu0.b32.cont [3/16] %v747, 128
        %756 = vxpose.xlu0.b32.cont [4/16] %v748, 128
        %757 = vxpose.xlu0.b32.cont [5/16] %v749, 128
        %758 = vxpose.xlu0.b32.cont [6/16] %v750, 128
        %759 = vxpose.xlu0.b32.cont [7/16] %v751, 128
        %760 = vxpose.xlu0.b32.cont [8/16] %v752, 128
        %761 = vxpose.xlu0.b32.cont [9/16] 0.0, 128
        %762 = vxpose.xlu0.b32.cont [10/16] 0.0, 128
        %763 = vxpose.xlu0.b32.cont [11/16] 0.0, 128
        %764 = vxpose.xlu0.b32.cont [12/16] 0.0, 128
        %765 = vxpose.xlu0.b32.cont [13/16] 0.0, 128
        %766 = vxpose.xlu0.b32.cont [14/16] 0.0, 128
        %767 = vxpose.xlu0.b32.cont [15/16] 0.0, 128
        %768 = vxpose.xlu0.b32.end [16/16] 0.0, 128
        %v769 = vpop.trf.xlu0
        %v770 = vpop.trf.xlu0
        %v771 = vpop.trf.xlu0
        %v772 = vpop.trf.xlu0
        %v773 = vpop.trf.xlu0
        %v774 = vpop.trf.xlu0
        %v775 = vpop.trf.xlu0
        %v776 = vpop.trf.xlu0
        %v777 = vpop.trf.xlu0
        %v778 = vpop.trf.xlu0
        %v779 = vpop.trf.xlu0
        %v780 = vpop.trf.xlu0
        %v781 = vpop.trf.xlu0
        %v782 = vpop.trf.xlu0
        %v783 = vpop.trf.xlu0
        %v784 = vpop.trf.xlu0
        %vm785 = vcmask 523264
        %786 = vst.msk [vmem:[%s163] sm:$0xff] %vm785, %v769
        %s787 = sand.u32 %s93, 1
        %s788 = scalar_lea.sflag [#allocation3], %s787
        %s789 = sand.u32 %s93, 1
        %s790 = smul.addr %s789, 8
        %s791 = scalar_lea.vmem [#allocation2], %s790
        // Predicated region
        $region33: #{tpu_custom_call.1} parent=31 // pred_check
          %p792 = pneg %p103
        $region34: #{tpu_custom_call.1} parent=31 // pred_check_branch
          %794 = sbr.rel (%p792) target = $region36
        $region35: #{tpu_custom_call.1} parent=31 // pred_region
          %s796 = ssub.s32 128, 128
          %797 = vsyncadd %s788, %s796
          %s798 = smul.addr %s17, 128
          %s799 = scalar_lea.hbm %s3, %s798
          %s801 = sshll.u32 %s791, 4
          %s802 = int_to_ptr.vmem [resolvable:$true] %s801
          %804 = dma.vmem_to_hbm [thread:$0]  %s802, 128, %s799, %s788
        $region36: #{tpu_custom_call.1} parent=31 // pred_fallthru
          _
      $region32: #{tpu_custom_call.1} parent=5 // pred_fallthru
        _
      %p805 = scmp.le.s32.totalorder 2, %s12
      // Predicated region
      $region37: #{tpu_custom_call.1} parent=5 // pred_check
        %p806 = pneg %p805
      $region38: #{tpu_custom_call.1} parent=5 // pred_check_branch
        %808 = sbr.rel (%p806) target = $region40
      $region39: #{tpu_custom_call.1} parent=5 // pred_region
        %s809 = ssub.s32 %s12, 2
        // Predicated region
        $region41: #{tpu_custom_call.1} parent=39 // pred_check
          %p810 = pneg %p109
        $region42: #{tpu_custom_call.1} parent=39 // pred_check_branch
          %812 = sbr.rel (%p810) target = $region44
        $region43: #{tpu_custom_call.1} parent=39 // pred_region
          %s813 = sand.u32 %s94, 1
          %s814 = scalar_lea.sflag [#allocation3], %s813
          %s815 = sand.u32 %s94, 1
          %s816 = smul.addr %s815, 8
          %s817 = scalar_lea.vmem [#allocation2], %s816
          %818 = dma.done %s814, 128
        $region44: #{tpu_custom_call.1} parent=39 // pred_fallthru
          _
      $region40: #{tpu_custom_call.1} parent=5 // pred_fallthru
        _
    $region6: #{tpu_custom_call.1} parent=1 // loop_footer
      %s16 = sadd.s32 1, %s12
    $region7: #{tpu_custom_call.1} parent=1 // loop_footer_branch
      %11 = sbr.rel target = $region3
    $region8: #{tpu_custom_call.1} parent=1 // loop_exit
      _
    %819 = vsyncpa [#allocation3], 1
    %s820 = scalar_lea.sflag [#allocation3], 1
    %821 = vsyncpa %s820, 1

</llo_original>
